<compile_context>
chip_gen: v7x
topology: tpu7x:2x2x1
jax: 0.10.0
libtpu: 0.0.40
codegen_flags: <defaults>
</compile_context>

<pallas_src>
import functools

import jax
import jax.numpy as jnp
from jax.experimental import pallas as pl
from jax.experimental.pallas import tpu as pltpu


def _dice_ce_kernel(x_ref, t_ref, ce_out_ref, dice_out_ref,
                    ce_acc, inter_acc, union_acc, *, hw, tile, smooth):
    h = pl.program_id(1)

    @pl.when(h == 0)
    def _init():
        ce_acc[...] = jnp.zeros_like(ce_acc)
        inter_acc[...] = jnp.zeros_like(inter_acc)
        union_acc[...] = jnp.zeros_like(union_acc)

    x = x_ref[0].astype(jnp.float32)          # (C, T) logits tile
    t = t_ref[0]                              # (1, T) int32 targets
    C, T = x.shape

    # Global column index -> lane-valid mask for the (possibly partial) tile.
    col = jax.lax.broadcasted_iota(jnp.int32, (1, T), 1) + h * tile
    valid = col < hw                                           # (1, T) bool

    # Single one-hot mask, reused everywhere (no i32->f32 converts).
    class_ids = jax.lax.broadcasted_iota(jnp.int32, (C, T), 0)
    mask = (class_ids == t) & valid                            # (C, T) bool

    # Scrub padded lanes so exp() never sees garbage (no NaN/Inf leakage).
    xm = jnp.where(valid, x, 0.0)                              # (C, T)

    # log-softmax pieces along the channel (sublane) axis.
    m = jnp.max(xm, axis=0, keepdims=True)                     # (1, T)
    ex = jnp.exp(xm - m)                                       # (C, T)
    denom = jnp.sum(ex, axis=0, keepdims=True)                 # (1, T)
    inv_denom = pl.reciprocal(denom, approx=False)             # (1, T)
    p = ex * inv_denom                                         # (C, T) softmax
    lse = m + jnp.log(denom)                                   # (1, T)

    # Cross-entropy partial: sum over valid pixels of (lse - logit[target]).
    tgt_logit = jnp.sum(jnp.where(mask, xm, 0.0), axis=0, keepdims=True)
    ce_acc[...] += jnp.sum(jnp.where(valid, lse - tgt_logit, 0.0),
                           keepdims=True)

    # Dice partials: per-class intersection and union accumulators.
    onehot = jnp.where(mask, 1.0, 0.0)                         # (C, T)
    inter_acc[...] += jnp.sum(jnp.where(mask, p, 0.0), axis=1, keepdims=True)
    union_acc[...] += jnp.sum(jnp.where(valid, p, 0.0) + onehot,
                              axis=1, keepdims=True)

    @pl.when(h == pl.num_programs(1) - 1)
    def _finalize():
        dice = (2.0 * inter_acc[...] + smooth) / (union_acc[...] + smooth)
        ce_out_ref[0] = ce_acc[...]                            # (1, 1)
        dice_out_ref[0] = jnp.sum(dice, keepdims=True)         # (1, 1)


def dice_cross_entropy_loss(logits, targets, *, dice_weight=0.5,
                            smooth=1e-5, max_lane_tile=16384):
    """logits: (N, C, H, W) float; targets: (N, 1, H, W) int class indices."""
    N, C, H, W = logits.shape
    HW = H * W

    x = logits.reshape(N, C, HW)              # keep native dtype (no upcast copy)
    t = targets.reshape(N, 1, HW)
    if t.dtype != jnp.int32:
        t = t.astype(jnp.int32)

    # Spatial tile: whole image if small, otherwise a multiple of 128 lanes.
    tile = HW if HW <= max_lane_tile else max_lane_tile
    num_h = -(-HW // tile)

    kernel = functools.partial(_dice_ce_kernel, hw=HW, tile=tile,
                               smooth=float(smooth))

    ce_sums, dice_sums = pl.pallas_call(
        kernel,
        out_shape=(jax.ShapeDtypeStruct((N, 1, 1), jnp.float32),
                   jax.ShapeDtypeStruct((N, 1, 1), jnp.float32)),
        grid_spec=pltpu.PrefetchScalarGridSpec(
            num_scalar_prefetch=0,
            grid=(N, num_h),
            in_specs=[
                pl.BlockSpec((1, C, tile), lambda b, h: (b, 0, h)),
                pl.BlockSpec((1, 1, tile), lambda b, h: (b, 0, h)),
            ],
            out_specs=[
                pl.BlockSpec((1, 1, 1), lambda b, h: (b, 0, 0)),
                pl.BlockSpec((1, 1, 1), lambda b, h: (b, 0, 0)),
            ],
            scratch_shapes=[
                pltpu.VMEM((1, 1), jnp.float32),   # per-batch CE partial sum
                pltpu.VMEM((C, 1), jnp.float32),   # per-class intersection
                pltpu.VMEM((C, 1), jnp.float32),   # per-class union
            ],
        ),
        compiler_params=pltpu.CompilerParams(
            dimension_semantics=("parallel", "arbitrary"),
            vmem_limit_bytes=48 * 1024 * 1024),
    )(x, t)

    # Tiny final reduction in plain JAX; constants folded at trace time.
    inv_nhw = 1.0 / float(N * HW)
    inv_nc = 1.0 / float(N * C)
    ce_mean = jnp.sum(ce_sums) * inv_nhw
    dice_loss = 1.0 - jnp.sum(dice_sums) * inv_nc
    dw = float(dice_weight)
    return (1.0 - dw) * ce_mean + dw * dice_loss


def _reference(logits, targets, dice_weight=0.5):
    """Plain-JAX reference mirroring the PyTorch module semantics."""
    N, C, H, W = logits.shape
    tgt = targets.reshape(N, H, W)
    logp = jax.nn.log_softmax(logits.astype(jnp.float32), axis=1)
    onehot = jax.nn.one_hot(tgt, C, dtype=jnp.float32).transpose(0, 3, 1, 2)
    ce = -jnp.mean(jnp.sum(logp * onehot, axis=1))
    p = jax.nn.softmax(logits.astype(jnp.float32), axis=1)
    inter = jnp.sum(p * onehot, axis=(2, 3))
    union = jnp.sum(p, axis=(2, 3)) + jnp.sum(onehot, axis=(2, 3))
    smooth = 1e-5
    dice = (2.0 * inter + smooth) / (union + smooth)
    dice_loss = 1.0 - jnp.mean(dice)
    return (1.0 - dice_weight) * ce + dice_weight * dice_loss


if __name__ == "__main__":
    key = jax.random.PRNGKey(0)
    k1, k2, k3, k4 = jax.random.split(key, 4)

    # Case 1: small image, single spatial tile per batch (num_classes=22).
    N, C, H, W = 2, 22, 16, 16
    logits = jax.random.normal(k1, (N, C, H, W), dtype=jnp.float32)
    targets = jax.random.randint(k2, (N, 1, H, W), 0, C, dtype=jnp.int32)
    loss = jax.block_until_ready(
        dice_cross_entropy_loss(logits, targets, dice_weight=0.5))
    ref = _reference(logits, targets, dice_weight=0.5)
    assert jnp.allclose(loss, ref, rtol=1e-3, atol=1e-4), (loss, ref)

    # Case 2: force the tiled spatial path with a partial (masked) last tile.
    N2, H2, W2 = 2, 18, 18               # HW = 324 -> 128-lane tiles, last partial
    logits2 = jax.random.normal(k3, (N2, C, H2, W2), dtype=jnp.float32)
    targets2 = jax.random.randint(k4, (N2, 1, H2, W2), 0, C, dtype=jnp.int32)
    loss2 = jax.block_until_ready(
        dice_cross_entropy_loss(logits2, targets2, dice_weight=0.5,
                                max_lane_tile=128))
    ref2 = _reference(logits2, targets2, dice_weight=0.5)
    assert jnp.allclose(loss2, ref2, rtol=1e-3, atol=1e-4), (loss2, ref2)

    print("KERNEL_OK")
</pallas_src>

<mosaic_0001>
module attributes {stable_mosaic.version = 11 : i64} {
  func.func @_dice_ce_kernel(%arg0: i32, %arg1: i32, %arg2: memref<1x22x256xf32, #tpu.memory_space<vmem>>, %arg3: memref<1x1x256xi32, #tpu.memory_space<vmem>>, %arg4: memref<1x1x1xf32, #tpu.memory_space<vmem>>, %arg5: memref<1x1x1xf32, #tpu.memory_space<vmem>>, %arg6: memref<1x1xf32, #tpu.memory_space<vmem>>, %arg7: memref<22x1xf32, #tpu.memory_space<vmem>>, %arg8: memref<22x1xf32, #tpu.memory_space<vmem>>) attributes {dimension_semantics = [#tpu.dimension_semantics<parallel>, #tpu.dimension_semantics<arbitrary>], iteration_bounds = array<i64: 2, 1>, scalar_prefetch = 0 : i64, scratch_operands = 3 : i64, tpu.core_type = #tpu.core_type<tc>, window_params = [{transform_indices = @transform_0, window_bounds = array<i64: 1, 22, 256>}, {transform_indices = @transform_1, window_bounds = array<i64: 1, 1, 256>}, {transform_indices = @transform_2, window_bounds = array<i64: 1, 1, 1>}, {transform_indices = @transform_3, window_bounds = array<i64: 1, 1, 1>}]} {
    %c0_i32 = arith.constant 0 : i32
    %0 = arith.cmpi eq, %arg1, %c0_i32 : i32
    %1 = arith.extui %0 : i1 to i32
    %c0_i32_0 = arith.constant 0 : i32
    %2 = arith.cmpi ne, %1, %c0_i32_0 : i32
    scf.if %2 {
      %cst_33 = arith.constant 0.000000e+00 : f32
      %72 = vector.broadcast %cst_33 : f32 to vector<1x1xf32>
      %c0_34 = arith.constant 0 : index
      %c0_35 = arith.constant 0 : index
      %73 = vector.load %arg6[%c0_34, %c0_35] : memref<1x1xf32, #tpu.memory_space<vmem>>, vector<1x1xf32>
      tpu.vector_store %arg6[%c0_34, %c0_35], %72 {strides = array<i32>} : memref<1x1xf32, #tpu.memory_space<vmem>>, vector<1x1xf32>,
      %cst_36 = arith.constant 0.000000e+00 : f32
      %74 = vector.broadcast %cst_36 : f32 to vector<22x1xf32>
      %c0_37 = arith.constant 0 : index
      %c0_38 = arith.constant 0 : index
      %75 = vector.load %arg7[%c0_37, %c0_38] : memref<22x1xf32, #tpu.memory_space<vmem>>, vector<22x1xf32>
      tpu.vector_store %arg7[%c0_37, %c0_38], %74 {strides = array<i32>} : memref<22x1xf32, #tpu.memory_space<vmem>>, vector<22x1xf32>,
      %cst_39 = arith.constant 0.000000e+00 : f32
      %76 = vector.broadcast %cst_39 : f32 to vector<22x1xf32>
      %c0_40 = arith.constant 0 : index
      %c0_41 = arith.constant 0 : index
      %77 = vector.load %arg8[%c0_40, %c0_41] : memref<22x1xf32, #tpu.memory_space<vmem>>, vector<22x1xf32>
      tpu.vector_store %arg8[%c0_40, %c0_41], %76 {strides = array<i32>} : memref<22x1xf32, #tpu.memory_space<vmem>>, vector<22x1xf32>,
    } else {
    }
    %c0 = arith.constant 0 : index
    %c0_1 = arith.constant 0 : index
    %c0_2 = arith.constant 0 : index
    %3 = vector.load %arg2[%c0, %c0_1, %c0_2] : memref<1x22x256xf32, #tpu.memory_space<vmem>>, vector<1x22x256xf32>
    %4 = vector.shape_cast %3 : vector<1x22x256xf32> to vector<22x256xf32>
    %c0_3 = arith.constant 0 : index
    %c0_4 = arith.constant 0 : index
    %c0_5 = arith.constant 0 : index
    %5 = vector.load %arg3[%c0_3, %c0_4, %c0_5] : memref<1x1x256xi32, #tpu.memory_space<vmem>>, vector<1x1x256xi32>
    %6 = vector.shape_cast %5 : vector<1x1x256xi32> to vector<1x256xi32>
    %7 = tpu.iota {dimensions = array<i32: 1>} : vector<1x256xi32>
    %c256_i32 = arith.constant 256 : i32
    %8 = arith.muli %arg1, %c256_i32 : i32
    %9 = vector.broadcast %8 : i32 to vector<1x256xi32>
    %10 = arith.addi %7, %9 : vector<1x256xi32>
    %c256_i32_6 = arith.constant 256 : i32
    %11 = vector.broadcast %c256_i32_6 : i32 to vector<1x256xi32>
    %12 = arith.cmpi slt, %10, %11 : vector<1x256xi32>
    %13 = tpu.iota {dimensions = array<i32: 0>} : vector<22x256xi32>
    %14 = vector.broadcast %6 : vector<1x256xi32> to vector<22x256xi32>
    %15 = arith.cmpi eq, %13, %14 : vector<22x256xi32>
    %16 = vector.broadcast %12 : vector<1x256xi1> to vector<22x256xi1>
    %17 = arith.andi %15, %16 : vector<22x256xi1>
    %cst = arith.constant 0.000000e+00 : f32
    %18 = vector.shape_cast %12 : vector<1x256xi1> to vector<1x256xi1>
    %19 = vector.broadcast %18 : vector<1x256xi1> to vector<22x256xi1>
    %20 = vector.broadcast %cst : f32 to vector<22x256xf32>
    %21 = arith.select %19, %4, %20 : vector<22x256xi1>, vector<22x256xf32>
    %cst_7 = arith.constant dense<0xFF800000> : vector<256xf32>
    %22 = vector.multi_reduction <maximumf>, %21, %cst_7 [0] : vector<22x256xf32> to vector<256xf32>
    %23 = vector.shape_cast %22 : vector<256xf32> to vector<1x256xf32>
    %24 = vector.broadcast %23 : vector<1x256xf32> to vector<22x256xf32>
    %25 = arith.subf %21, %24 : vector<22x256xf32>
    %26 = math.exp %25 : vector<22x256xf32>
    %cst_8 = arith.constant dense<0.000000e+00> : vector<256xf32>
    %27 = vector.multi_reduction <add>, %26, %cst_8 [0] : vector<22x256xf32> to vector<256xf32>
    %28 = vector.shape_cast %27 : vector<256xf32> to vector<1x256xf32>
    %29 = tpu.reciprocal %28 : vector<1x256xf32> -> vector<1x256xf32>
    %30 = vector.broadcast %29 : vector<1x256xf32> to vector<22x256xf32>
    %31 = arith.mulf %26, %30 : vector<22x256xf32>
    %32 = math.log %28 : vector<1x256xf32>
    %33 = arith.addf %23, %32 : vector<1x256xf32>
    %cst_9 = arith.constant 0.000000e+00 : f32
    %34 = vector.broadcast %cst_9 : f32 to vector<22x256xf32>
    %35 = arith.select %17, %21, %34 : vector<22x256xi1>, vector<22x256xf32>
    %cst_10 = arith.constant dense<0.000000e+00> : vector<256xf32>
    %36 = vector.multi_reduction <add>, %35, %cst_10 [0] : vector<22x256xf32> to vector<256xf32>
    %37 = vector.shape_cast %36 : vector<256xf32> to vector<1x256xf32>
    %c0_11 = arith.constant 0 : index
    %c0_12 = arith.constant 0 : index
    %38 = vector.load %arg6[%c0_11, %c0_12] : memref<1x1xf32, #tpu.memory_space<vmem>>, vector<1x1xf32>
    %39 = arith.subf %33, %37 : vector<1x256xf32>
    %cst_13 = arith.constant 0.000000e+00 : f32
    %40 = vector.broadcast %cst_13 : f32 to vector<1x256xf32>
    %41 = arith.select %12, %39, %40 : vector<1x256xi1>, vector<1x256xf32>
    %42 = vector.shape_cast %41 : vector<1x256xf32> to vector<1x1x256xf32>
    %cst_14 = arith.constant dense<0.000000e+00> : vector<1xf32>
    %43 = vector.multi_reduction <add>, %42, %cst_14 [1, 2] : vector<1x1x256xf32> to vector<1xf32>
    %44 = vector.shape_cast %43 : vector<1xf32> to vector<1x1x1xf32>
    %45 = vector.extract %44[0, 0, 0] : f32 from vector<1x1x1xf32>
    %46 = vector.broadcast %45 : f32 to vector<1x1xf32>
    %47 = arith.addf %38, %46 : vector<1x1xf32>
    %c0_15 = arith.constant 0 : index
    %c0_16 = arith.constant 0 : index
    %48 = vector.load %arg6[%c0_15, %c0_16] : memref<1x1xf32, #tpu.memory_space<vmem>>, vector<1x1xf32>
    tpu.vector_store %arg6[%c0_15, %c0_16], %47 {strides = array<i32>} : memref<1x1xf32, #tpu.memory_space<vmem>>, vector<1x1xf32>,
    %cst_17 = arith.constant 1.000000e+00 : f32
    %cst_18 = arith.constant 0.000000e+00 : f32
    %49 = vector.broadcast %cst_17 : f32 to vector<22x256xf32>
    %50 = vector.broadcast %cst_18 : f32 to vector<22x256xf32>
    %51 = arith.select %17, %49, %50 : vector<22x256xi1>, vector<22x256xf32>
    %c0_19 = arith.constant 0 : index
    %c0_20 = arith.constant 0 : index
    %52 = vector.load %arg7[%c0_19, %c0_20] : memref<22x1xf32, #tpu.memory_space<vmem>>, vector<22x1xf32>
    %cst_21 = arith.constant 0.000000e+00 : f32
    %53 = vector.broadcast %cst_21 : f32 to vector<22x256xf32>
    %54 = arith.select %17, %31, %53 : vector<22x256xi1>, vector<22x256xf32>
    %cst_22 = arith.constant dense<0.000000e+00> : vector<22xf32>
    %55 = vector.multi_reduction <add>, %54, %cst_22 [1] : vector<22x256xf32> to vector<22xf32>
    %56 = vector.shape_cast %55 : vector<22xf32> to vector<22x1xf32>
    %57 = arith.addf %52, %56 : vector<22x1xf32>
    %c0_23 = arith.constant 0 : index
    %c0_24 = arith.constant 0 : index
    %58 = vector.load %arg7[%c0_23, %c0_24] : memref<22x1xf32, #tpu.memory_space<vmem>>, vector<22x1xf32>
    tpu.vector_store %arg7[%c0_23, %c0_24], %57 {strides = array<i32>} : memref<22x1xf32, #tpu.memory_space<vmem>>, vector<22x1xf32>,
    %c0_25 = arith.constant 0 : index
    %c0_26 = arith.constant 0 : index
    %59 = vector.load %arg8[%c0_25, %c0_26] : memref<22x1xf32, #tpu.memory_space<vmem>>, vector<22x1xf32>
    %cst_27 = arith.constant 0.000000e+00 : f32
    %60 = vector.shape_cast %12 : vector<1x256xi1> to vector<1x256xi1>
    %61 = vector.broadcast %60 : vector<1x256xi1> to vector<22x256xi1>
    %62 = vector.broadcast %cst_27 : f32 to vector<22x256xf32>
    %63 = arith.select %61, %31, %62 : vector<22x256xi1>, vector<22x256xf32>
    %64 = arith.addf %63, %51 : vector<22x256xf32>
    %cst_28 = arith.constant dense<0.000000e+00> : vector<22xf32>
    %65 = vector.multi_reduction <add>, %64, %cst_28 [1] : vector<22x256xf32> to vector<22xf32>
    %66 = vector.shape_cast %65 : vector<22xf32> to vector<22x1xf32>
    %67 = arith.addf %59, %66 : vector<22x1xf32>
    %c0_29 = arith.constant 0 : index
    %c0_30 = arith.constant 0 : index
    %68 = vector.load %arg8[%c0_29, %c0_30] : memref<22x1xf32, #tpu.memory_space<vmem>>, vector<22x1xf32>
    tpu.vector_store %arg8[%c0_29, %c0_30], %67 {strides = array<i32>} : memref<22x1xf32, #tpu.memory_space<vmem>>, vector<22x1xf32>,
    %c0_i32_31 = arith.constant 0 : i32
    %69 = arith.cmpi eq, %arg1, %c0_i32_31 : i32
    %70 = arith.extui %69 : i1 to i32
    %c0_i32_32 = arith.constant 0 : i32
    %71 = arith.cmpi ne, %70, %c0_i32_32 : i32
    scf.if %71 {
      %c0_33 = arith.constant 0 : index
      %c0_34 = arith.constant 0 : index
      %72 = vector.load %arg7[%c0_33, %c0_34] : memref<22x1xf32, #tpu.memory_space<vmem>>, vector<22x1xf32>
      %cst_35 = arith.constant 2.000000e+00 : f32
      %73 = vector.broadcast %cst_35 : f32 to vector<22x1xf32>
      %74 = arith.mulf %73, %72 : vector<22x1xf32>
      %cst_36 = arith.constant 9.99999974E-6 : f32
      %75 = vector.broadcast %cst_36 : f32 to vector<22x1xf32>
      %76 = arith.addf %74, %75 : vector<22x1xf32>
      %c0_37 = arith.constant 0 : index
      %c0_38 = arith.constant 0 : index
      %77 = vector.load %arg8[%c0_37, %c0_38] : memref<22x1xf32, #tpu.memory_space<vmem>>, vector<22x1xf32>
      %cst_39 = arith.constant 9.99999974E-6 : f32
      %78 = vector.broadcast %cst_39 : f32 to vector<22x1xf32>
      %79 = arith.addf %77, %78 : vector<22x1xf32>
      %80 = arith.divf %76, %79 : vector<22x1xf32>
      %c0_40 = arith.constant 0 : index
      %c0_41 = arith.constant 0 : index
      %81 = vector.load %arg6[%c0_40, %c0_41] : memref<1x1xf32, #tpu.memory_space<vmem>>, vector<1x1xf32>
      %c0_42 = arith.constant 0 : index
      %c0_43 = arith.constant 0 : index
      %c0_44 = arith.constant 0 : index
      %82 = vector.load %arg4[%c0_42, %c0_43, %c0_44] : memref<1x1x1xf32, #tpu.memory_space<vmem>>, vector<1x1x1xf32>
      %83 = vector.shape_cast %82 : vector<1x1x1xf32> to vector<1x1xf32>
      %84 = vector.shape_cast %81 : vector<1x1xf32> to vector<1x1x1xf32>
      tpu.vector_store %arg4[%c0_42, %c0_43, %c0_44], %84 {strides = array<i32>} : memref<1x1x1xf32, #tpu.memory_space<vmem>>, vector<1x1x1xf32>,
      %85 = vector.shape_cast %80 : vector<22x1xf32> to vector<1x22x1xf32>
      %cst_45 = arith.constant dense<0.000000e+00> : vector<1xf32>
      %86 = vector.multi_reduction <add>, %85, %cst_45 [1, 2] : vector<1x22x1xf32> to vector<1xf32>
      %87 = vector.shape_cast %86 : vector<1xf32> to vector<1x1x1xf32>
      %88 = vector.extract %87[0, 0, 0] : f32 from vector<1x1x1xf32>
      %89 = vector.broadcast %88 : f32 to vector<1x1xf32>
      %c0_46 = arith.constant 0 : index
      %c0_47 = arith.constant 0 : index
      %c0_48 = arith.constant 0 : index
      %90 = vector.load %arg5[%c0_46, %c0_47, %c0_48] : memref<1x1x1xf32, #tpu.memory_space<vmem>>, vector<1x1x1xf32>
      %91 = vector.shape_cast %90 : vector<1x1x1xf32> to vector<1x1xf32>
      %92 = vector.shape_cast %89 : vector<1x1xf32> to vector<1x1x1xf32>
      tpu.vector_store %arg5[%c0_46, %c0_47, %c0_48], %92 {strides = array<i32>} : memref<1x1x1xf32, #tpu.memory_space<vmem>>, vector<1x1x1xf32>,
    } else {
    }
    return
  }
  func.func @transform_0(%arg0: i32, %arg1: i32) -> (i32, i32, i32) {
    %c0_i32 = arith.constant 0 : i32
    %c0_i32_0 = arith.constant 0 : i32
    return %arg0, %c0_i32, %arg1 : i32, i32, i32
  }
  func.func @transform_1(%arg0: i32, %arg1: i32) -> (i32, i32, i32) {
    %c0_i32 = arith.constant 0 : i32
    %c0_i32_0 = arith.constant 0 : i32
    return %arg0, %c0_i32, %arg1 : i32, i32, i32
  }
  func.func @transform_2(%arg0: i32, %arg1: i32) -> (i32, i32, i32) {
    %c0_i32 = arith.constant 0 : i32
    %c0_i32_0 = arith.constant 0 : i32
    %c0_i32_1 = arith.constant 0 : i32
    return %arg0, %c0_i32, %c0_i32_0 : i32, i32, i32
  }
  func.func @transform_3(%arg0: i32, %arg1: i32) -> (i32, i32, i32) {
    %c0_i32 = arith.constant 0 : i32
    %c0_i32_0 = arith.constant 0 : i32
    %c0_i32_1 = arith.constant 0 : i32
    return %arg0, %c0_i32, %c0_i32_0 : i32, i32, i32
  }
}

</mosaic_0001>

<llo_original>
// kernel: tpu_custom_call.1
$region0: #{tpu_custom_call.1}
  #allocation0 [shape = 'u32[]', space=smem, size = 0x4, offset = 0x4, fixed_abs, tag = 'smem constant byte address 0x4 - core index']
  #allocation1 [shape = 'u32[144,128]{1,0:T(1,128)}', space=vmem, size = 0x12000, scoped, tag = 'internal scratch']
  #allocation2 [shape = 'f32[1,1]{1,0:T(1,128)}', space=vmem, size = 0x200, scoped, tag = 'scratch operand']
  #allocation3 [shape = 'f32[22,1]{1,0:T(8,128)}', space=vmem, size = 0x3000, scoped, tag = 'scratch operand']
  #allocation4 [shape = 'f32[22,1]{1,0:T(8,128)}', space=vmem, size = 0x3000, scoped, tag = 'scratch operand']
  %s0 = inlined_call_operand.vmem [shape: f32[2,22,256], index: 0, kind: input, shape index: {}]
  %s1 = inlined_call_operand.vmem [shape: s32[2,1,256], index: 1, kind: input, shape index: {}]
  %s2 = inlined_call_operand.vmem [shape: f32[2,1,1], index: 2, kind: output, shape index: {0}]
  %s3 = inlined_call_operand.vmem [shape: f32[2,1,1], index: 3, kind: output, shape index: {1}]
  %4 = xla_tuple %s2, %s3
  %s5 = sld [smem:[#allocation0]]
  $region57: #{tpu_custom_call.1} parent=0
    _
  %s7 = ssub.s32 1, %s5
  %s8 = scalar_select 0, %s7, %s5
  loop: start=0, step=1, limit=4
  $region2: #{tpu_custom_call.1} parent=0 // loop_pre_header
    _
  $region3: #{tpu_custom_call.1} parent=0 // loop_header
    %s10 = sphi 0, %s14
    %p11 = scmp.ge.s32.totalorder %s10, 4
    %s17 = sphi 0, %s29
    %s18 = sphi 0, %s25
    %s19 = sphi 0, %s17
    %s20 = sphi 0, %s18
    %s21 = sphi 0, %s19
    %s22 = sphi 0, %s20
    %s34 = sphi 0, %s36
    %s37 = sphi 0, %s34
    %s38 = sphi 0, %s37
    %s54 = sphi 0, %s38
    %s62 = sphi 0, %s64
    %s65 = sphi 0, %s62
    %s66 = sphi 0, %s65
    %s82 = sphi 0, %s66
    %s88 = sphi 0, %s90
    %s91 = sphi 0, %s88
    %s92 = sphi 0, %s91
    %s108 = sphi 0, %s92
    %s114 = sphi 0, %s116
    %s117 = sphi 0, %s114
    %s118 = sphi 0, %s117
    %s134 = sphi 0, %s118
  $region4: #{tpu_custom_call.1} parent=0 // loop_header_branch
    %13 = sbr.rel (%p11) target = $region8
  $region5: #{tpu_custom_call.1} parent=0 // loop_body
    %s15 = ssub.s32 %s10, 1
    %s16 = ssub.s32 %s10, 2
    %s23 = sadd.s32 1, %s18
    %p24 = scmp.ge.s32.totalorder %s23, 1
    %s25 = scalar_select %p24, 0, %s23
    %s26 = sadd.s32 1, %s17
    %s27 = scalar_select %p24, %s26, %s17
    %p28 = scmp.ge.s32.totalorder %s27, 2
    %s29 = scalar_select %p28, 0, %s27
    %s30 = ssub.s32 %s17, %s29
    %s31 = ssub.s32 %s18, %s25
    %s32 = sor.u32 %s30, %s31
    %p33 = scmp.eq.s32.totalorder %s32, 0
    %s35 = sadd.s32 %s34, 1
    %s36 = scalar_select %p33, %s34, %s35
    %p39 = pneg %p33
    %p40 = scmp.eq.s32.totalorder %s10, 1
    %p41 = por %p39, %p40
    %p42 = scmp.ne.s32.totalorder %s34, %s37
    %p43 = scmp.eq.s32.totalorder %s10, 0
    %p44 = por %p42, %p43
    %p45 = scmp.ne.s32.totalorder %s34, %s37
    %p46 = scmp.eq.s32.totalorder %s15, 1
    %p47 = por %p45, %p46
    %p48 = scmp.ne.s32.totalorder %s37, %s38
    %p49 = scmp.eq.s32.totalorder %s15, 0
    %p50 = por %p48, %p49
    %p51 = scmp.ne.s32.totalorder %s37, %s38
    %p52 = scmp.eq.s32.totalorder %s16, 1
    %p53 = por %p51, %p52
    %p55 = scmp.ne.s32.totalorder %s38, %s54
    %p56 = scmp.eq.s32.totalorder %s16, 0
    %p57 = por %p55, %p56
    %s58 = ssub.s32 %s17, %s29
    %s59 = ssub.s32 %s18, %s25
    %s60 = sor.u32 %s58, %s59
    %p61 = scmp.eq.s32.totalorder %s60, 0
    %s63 = sadd.s32 %s62, 1
    %s64 = scalar_select %p61, %s62, %s63
    %p67 = pneg %p61
    %p68 = scmp.eq.s32.totalorder %s10, 1
    %p69 = por %p67, %p68
    %p70 = scmp.ne.s32.totalorder %s62, %s65
    %p71 = scmp.eq.s32.totalorder %s10, 0
    %p72 = por %p70, %p71
    %p73 = scmp.ne.s32.totalorder %s62, %s65
    %p74 = scmp.eq.s32.totalorder %s15, 1
    %p75 = por %p73, %p74
    %p76 = scmp.ne.s32.totalorder %s65, %s66
    %p77 = scmp.eq.s32.totalorder %s15, 0
    %p78 = por %p76, %p77
    %p79 = scmp.ne.s32.totalorder %s65, %s66
    %p80 = scmp.eq.s32.totalorder %s16, 1
    %p81 = por %p79, %p80
    %p83 = scmp.ne.s32.totalorder %s66, %s82
    %p84 = scmp.eq.s32.totalorder %s16, 0
    %p85 = por %p83, %p84
    %s86 = ssub.s32 %s17, %s29
    %p87 = scmp.eq.s32.totalorder %s86, 0
    %s89 = sadd.s32 %s88, 1
    %s90 = scalar_select %p87, %s88, %s89
    %p93 = pneg %p87
    %p94 = scmp.eq.s32.totalorder %s10, 1
    %p95 = por %p93, %p94
    %p96 = scmp.ne.s32.totalorder %s88, %s91
    %p97 = scmp.eq.s32.totalorder %s10, 0
    %p98 = por %p96, %p97
    %p99 = scmp.ne.s32.totalorder %s88, %s91
    %p100 = scmp.eq.s32.totalorder %s15, 1
    %p101 = por %p99, %p100
    %p102 = scmp.ne.s32.totalorder %s91, %s92
    %p103 = scmp.eq.s32.totalorder %s15, 0
    %p104 = por %p102, %p103
    %p105 = scmp.ne.s32.totalorder %s91, %s92
    %p106 = scmp.eq.s32.totalorder %s16, 1
    %p107 = por %p105, %p106
    %p109 = scmp.ne.s32.totalorder %s92, %s108
    %p110 = scmp.eq.s32.totalorder %s16, 0
    %p111 = por %p109, %p110
    %s112 = ssub.s32 %s17, %s29
    %p113 = scmp.eq.s32.totalorder %s112, 0
    %s115 = sadd.s32 %s114, 1
    %s116 = scalar_select %p113, %s114, %s115
    %p119 = pneg %p113
    %p120 = scmp.eq.s32.totalorder %s10, 1
    %p121 = por %p119, %p120
    %p122 = scmp.ne.s32.totalorder %s114, %s117
    %p123 = scmp.eq.s32.totalorder %s10, 0
    %p124 = por %p122, %p123
    %p125 = scmp.ne.s32.totalorder %s114, %s117
    %p126 = scmp.eq.s32.totalorder %s15, 1
    %p127 = por %p125, %p126
    %p128 = scmp.ne.s32.totalorder %s117, %s118
    %p129 = scmp.eq.s32.totalorder %s15, 0
    %p130 = por %p128, %p129
    %p131 = scmp.ne.s32.totalorder %s117, %s118
    %p132 = scmp.eq.s32.totalorder %s16, 1
    %p133 = por %p131, %p132
    %p135 = scmp.ne.s32.totalorder %s118, %s134
    %p136 = scmp.eq.s32.totalorder %s16, 0
    %p137 = por %p135, %p136
    %p138 = scmp.le.s32.totalorder 1, %s10
    %p139 = scmp.lt.s32.totalorder %s10, 3
    %p140 = pnand %p138, %p139
    %p141 = pneg %p140
    // Predicated region
    $region9: #{tpu_custom_call.1} parent=5 // pred_check
      _
    $region10: #{tpu_custom_call.1} parent=5 // pred_check_branch
      %143 = sbr.rel (%p140) target = $region12
    $region11: #{tpu_custom_call.1} parent=5 // pred_region
      %s144 = ssub.s32 %s10, 1
    $region12: #{tpu_custom_call.1} parent=5 // pred_fallthru
      _
    %p145 = scmp.lt.s32.totalorder %s10, 2
    // Predicated region
    $region13: #{tpu_custom_call.1} parent=5 // pred_check
      %p146 = pneg %p145
    $region14: #{tpu_custom_call.1} parent=5 // pred_check_branch
      %148 = sbr.rel (%p146) target = $region16
    $region15: #{tpu_custom_call.1} parent=5 // pred_region
      // Predicated region
      $region17: #{tpu_custom_call.1} parent=15 // pred_check
        %p149 = pneg %p44
      $region18: #{tpu_custom_call.1} parent=15 // pred_check_branch
        %151 = sbr.rel (%p149) target = $region20
      $region19: #{tpu_custom_call.1} parent=15 // pred_region
        %s152 = smul.u32 2, %s18
        %p153 = scmp.lt.s32.totalorder %s17, 1
        %s154 = scalar_select %p153, %s17, 1
        %p155 = scmp.lt.s32.totalorder %s152, 1
        %s156 = scalar_select %p155, %s152, 1
        %s157 = smul.addr %s154, 6
        %s158 = sadd.s32 %s156, %s157
        %s159 = smul.addr %s158, 8
        %s160 = scalar_lea.vmem %s0, %s159
        %s161 = smul.u32 2, %s18
      $region20: #{tpu_custom_call.1} parent=15 // pred_fallthru
        _
      // Predicated region
      $region21: #{tpu_custom_call.1} parent=15 // pred_check
        %p162 = pneg %p72
      $region22: #{tpu_custom_call.1} parent=15 // pred_check_branch
        %164 = sbr.rel (%p162) target = $region24
      $region23: #{tpu_custom_call.1} parent=15 // pred_region
        %s165 = smul.u32 2, %s18
        %p166 = scmp.lt.s32.totalorder %s17, 1
        %s167 = scalar_select %p166, %s17, 1
        %p168 = scmp.lt.s32.totalorder %s165, 1
        %s169 = scalar_select %p168, %s165, 1
        %s170 = smul.addr %s167, 2
        %s171 = sadd.s32 %s169, %s170
        %s172 = scalar_lea.vmem %s1, %s171
        %s173 = smul.u32 2, %s18
      $region24: #{tpu_custom_call.1} parent=15 // pred_fallthru
        _
    $region16: #{tpu_custom_call.1} parent=5 // pred_fallthru
      _
    %p174 = scmp.le.s32.totalorder 1, %s10
    %p175 = scmp.lt.s32.totalorder %s10, 3
    %p176 = pnand %p174, %p175
    %p177 = pneg %p176
    // Predicated region
    $region25: #{tpu_custom_call.1} parent=5 // pred_check
      _
    $region26: #{tpu_custom_call.1} parent=5 // pred_check_branch
      %179 = sbr.rel (%p176) target = $region28
    $region27: #{tpu_custom_call.1} parent=5 // pred_region
      %s180 = ssub.s32 %s10, 1
      %s181 = smul.u32 2, %s20
      %p182 = scmp.lt.s32.totalorder %s19, 1
      %s183 = scalar_select %p182, %s19, 1
      %p184 = scmp.lt.s32.totalorder %s181, 1
      %s185 = scalar_select %p184, %s181, 1
      %s186 = smul.addr %s183, 6
      %s187 = sadd.s32 %s185, %s186
      %s188 = smul.addr %s187, 8
      %s189 = scalar_lea.vmem %s0, %s188
      %p190 = pneg %p50
      %p191 = pneg %p47
      %s192 = smul.u32 2, %s20
      %p193 = scmp.lt.s32.totalorder %s19, 1
      %s194 = scalar_select %p193, %s19, 1
      %p195 = scmp.lt.s32.totalorder %s192, 1
      %s196 = scalar_select %p195, %s192, 1
      %s197 = smul.addr %s194, 2
      %s198 = sadd.s32 %s196, %s197
      %s199 = scalar_lea.vmem %s1, %s198
      %p200 = pneg %p78
      %p201 = pneg %p75
      %p202 = pneg %p104
      %p203 = pneg %p101
      %p204 = scmp.lt.s32.totalorder %s19, 1
      %s205 = scalar_select %p204, %s19, 1
      %s206 = scalar_lea.vmem %s2, %s205
      %p207 = pneg %p130
      %p208 = pneg %p127
      %p209 = scmp.lt.s32.totalorder %s19, 1
      %s210 = scalar_select %p209, %s19, 1
      %s211 = scalar_lea.vmem %s3, %s210
      %s212 = smul.u32 2, %s20
      %p213 = scmp.lt.s32.totalorder %s19, 1
      %s214 = scalar_select %p213, %s19, 1
      %p215 = scmp.lt.s32.totalorder %s212, 1
      %s216 = scalar_select %p215, %s212, 1
      %s217 = smul.addr %s214, 6
      %s218 = sadd.s32 %s216, %s217
      %s219 = smul.addr %s218, 8
      %s220 = scalar_lea.vmem %s0, %s219
      %s221 = smul.u32 2, %s20
      %s222 = smul.u32 2, %s20
      %p223 = scmp.lt.s32.totalorder %s19, 1
      %s224 = scalar_select %p223, %s19, 1
      %p225 = scmp.lt.s32.totalorder %s222, 1
      %s226 = scalar_select %p225, %s222, 1
      %s227 = smul.addr %s224, 2
      %s228 = sadd.s32 %s226, %s227
      %s229 = scalar_lea.vmem %s1, %s228
      %s230 = smul.u32 2, %s20
      %p231 = scmp.lt.s32.totalorder %s19, 1
      %s232 = scalar_select %p231, %s19, 1
      %s233 = scalar_lea.vmem %s2, %s232
      %p234 = scmp.lt.s32.totalorder %s19, 1
      %s235 = scalar_select %p234, %s19, 1
      %s236 = scalar_lea.vmem %s3, %s235
      %p237 = scmp.eq.s32.totalorder %s20, 0
      // Predicated region
      $region29: #{tpu_custom_call.1} parent=27 // pred_check
        %p238 = pneg %p237
      $region30: #{tpu_custom_call.1} parent=27 // pred_check_branch
        %240 = sbr.rel (%p238) target = $region32
      $region31: #{tpu_custom_call.1} parent=27 // pred_region
        %vm241 = vcmask 0
        %242 = vst.msk [vmem:[#allocation2] sm:$0x1] %vm241, 0.0
        %vm243 = vcmask 7168
        %244 = vst.msk [vmem:[#allocation3] sm:$0xff] %vm243, 0.0
        %245 = vst.msk [vmem:[#allocation3 + $0x8] sm:$0xff] %vm243, 0.0
        %vm246 = vcmask 5120
        %247 = vst.msk [vmem:[#allocation3 + $0x10] sm:$0x3f] %vm246, 0.0
        %248 = vst.msk [vmem:[#allocation4] sm:$0xff] %vm243, 0.0
        %249 = vst.msk [vmem:[#allocation4 + $0x8] sm:$0xff] %vm243, 0.0
        %250 = vst.msk [vmem:[#allocation4 + $0x10] sm:$0x3f] %vm246, 0.0
      $region32: #{tpu_custom_call.1} parent=27 // pred_fallthru
        _
      %v251 = vld [vmem:[%s220] sm:$0xff]
      %v252 = vld [vmem:[%s220 + $0x8] sm:$0xff]
      %v253 = vld [vmem:[%s220 + $0x10] sm:$0xff]
      %v254 = vld [vmem:[%s220 + $0x18] sm:$0xff]
      %v255 = vld [vmem:[%s220 + $0x20] sm:$0x3f]
      %v256 = vld [vmem:[%s220 + $0x28] sm:$0x3f]
      %v257 = vld [vmem:[%s229] sm:$0x3]
      %v258 = vlaneseq
      %v259 = vand.u32 %v258, 127
      %v260 = vadd.s32 %v259, 128
      %s261 = smul.u32 %s20, 256
      %v262 = vstv %s261
      %v263 = vadd.s32 %v259, %v262
      %v264 = vadd.s32 %v260, %v262
      %vm265 = vcmp.lt.s32.totalorder %v263, 256
      %vm266 = vcmp.lt.s32.totalorder %v264, 256
      %v267 = vlaneseq
      %v268 = vshrl.u32 %v267, 7
      %v269 = vadd.s32 %v268, 8
      %v270 = vadd.s32 %v268, 16
      %v271 = vlaneseq
      %v272 = vshrl.u32 %v271, 7
      %v273 = vsub.s32 0, %v272
      %v274 = vrot.slane %v257, %v273
      %v275 = vlaneseq
      %v276 = vshrl.u32 %v275, 7
      %v277 = vsub.s32 1, %v276
      %v278 = vrot.slane %v257, %v277
      %vm279 = vcmp.eq.s32.totalorder %v268, %v274
      %vm280 = vcmp.eq.s32.totalorder %v268, %v278
      %vm281 = vcmp.eq.s32.totalorder %v269, %v274
      %vm282 = vcmp.eq.s32.totalorder %v269, %v278
      %vm283 = vcmp.eq.s32.totalorder %v270, %v274
      %vm284 = vcmp.eq.s32.totalorder %v270, %v278
      %v285 = vsel %vm265, 1, 0
      %v286 = vsel %vm266, 1, 0
      %vm287 = vcmp.eq.s32.totalorder %v285, 1
      %vm288 = vcmp.eq.s32.totalorder %v286, 1
      %vm289 = vmand %vm279, %vm287
      %vm290 = vmand %vm280, %vm288
      %vm291 = vmand %vm281, %vm287
      %vm292 = vmand %vm282, %vm288
      %vm293 = vmand %vm283, %vm287
      %vm294 = vmand %vm284, %vm288
      %v295 = vsel %vm287, %v251, 0.0
      %v296 = vsel %vm288, %v252, 0.0
      %v297 = vsel %vm287, %v253, 0.0
      %v298 = vsel %vm288, %v254, 0.0
      %v299 = vsel %vm287, %v255, 0.0
      %v300 = vsel %vm288, %v256, 0.0
      %vm301 = vcmask 1045504
      %v302 = vsel %vm301, %v299, -inf
      %v303 = vmax.f32 %v295, %v302
      %v304 = vmax.f32 %v303, %v297
      %v305 = vrot.slane %v304, 4
      %v306 = vmax.f32 %v304, %v305
      %v307 = vrot.slane %v306, 2
      %v308 = vmax.f32 %v306, %v307
      %v309 = vrot.slane %v308, 1
      %v310 = vmax.f32 %v308, %v309
      %v311 = vsel %vm301, %v300, -inf
      %v312 = vmax.f32 %v296, %v311
      %v313 = vmax.f32 %v312, %v298
      %v314 = vrot.slane %v313, 4
      %v315 = vmax.f32 %v313, %v314
      %v316 = vrot.slane %v315, 2
      %v317 = vmax.f32 %v315, %v316
      %v318 = vrot.slane %v317, 1
      %v319 = vmax.f32 %v317, %v318
      %v320 = vsub.f32 %v295, %v310
      %v321 = vsub.f32 %v296, %v319
      %v322 = vsub.f32 %v297, %v310
      %v323 = vsub.f32 %v298, %v319
      %v324 = vsub.f32 %v299, %v310
      %v325 = vsub.f32 %v300, %v319
      %v326 = vmul.f32 %v320, 1.442695
      %v327 = vpow.pop %v326
      %v328 = vmul.f32 %v321, 1.442695
      %v329 = vpow.pop %v328
      %v330 = vmul.f32 %v322, 1.442695
      %v331 = vpow.pop %v330
      %v332 = vmul.f32 %v323, 1.442695
      %v333 = vpow.pop %v332
      %v334 = vmul.f32 %v324, 1.442695
      %v335 = vpow.pop %v334
      %v336 = vmul.f32 %v325, 1.442695
      %v337 = vpow.pop %v336
      %v338 = vadd.f32 %v327, %v331
      %v339 = vsel %vm301, %v335, 0.0
      %v340 = vadd.f32 %v338, %v339
      %v341 = vrot.slane %v340, 4
      %v342 = vadd.f32 %v340, %v341
      %v343 = vrot.slane %v342, 2
      %v344 = vadd.f32 %v342, %v343
      %v345 = vrot.slane %v344, 1
      %v346 = vadd.f32 %v344, %v345
      %v347 = vadd.f32 %v329, %v333
      %v348 = vsel %vm301, %v337, 0.0
      %v349 = vadd.f32 %v347, %v348
      %v350 = vrot.slane %v349, 4
      %v351 = vadd.f32 %v349, %v350
      %v352 = vrot.slane %v351, 2
      %v353 = vadd.f32 %v351, %v352
      %v354 = vrot.slane %v353, 1
      %v355 = vadd.f32 %v353, %v354
      %v356 = vrcp.pop %v346
      %v357 = vrcp.pop %v355
      %v358 = vmul.f32 %v327, %v356
      %v359 = vmul.f32 %v329, %v357
      %v360 = vmul.f32 %v331, %v356
      %v361 = vmul.f32 %v333, %v357
      %v362 = vmul.f32 %v335, %v356
      %v363 = vmul.f32 %v337, %v357
      %v364 = vlog2.pop %v346
      %v365 = vmul.f32 %v364, 0.6931472
      %v366 = vlog2.pop %v355
      %v367 = vmul.f32 %v366, 0.6931472
      %v368 = vadd.f32 %v310, %v365
      %v369 = vadd.f32 %v319, %v367
      %v370 = vsel %vm289, %v295, 0.0
      %v371 = vsel %vm290, %v296, 0.0
      %v372 = vsel %vm291, %v297, 0.0
      %v373 = vsel %vm292, %v298, 0.0
      %v374 = vsel %vm293, %v299, 0.0
      %v375 = vsel %vm294, %v300, 0.0
      %v376 = vadd.f32 %v370, %v372
      %v377 = vsel %vm301, %v374, 0.0
      %v378 = vadd.f32 %v376, %v377
      %v379 = vrot.slane %v378, 4
      %v380 = vadd.f32 %v378, %v379
      %v381 = vrot.slane %v380, 2
      %v382 = vadd.f32 %v380, %v381
      %v383 = vrot.slane %v382, 1
      %v384 = vadd.f32 %v382, %v383
      %v385 = vadd.f32 %v371, %v373
      %v386 = vsel %vm301, %v375, 0.0
      %v387 = vadd.f32 %v385, %v386
      %v388 = vrot.slane %v387, 4
      %v389 = vadd.f32 %v387, %v388
      %v390 = vrot.slane %v389, 2
      %v391 = vadd.f32 %v389, %v390
      %v392 = vrot.slane %v391, 1
      %v393 = vadd.f32 %v391, %v392
      %v394 = vld [vmem:[#allocation2] sm:$0x1]
      %v395 = vsub.f32 %v368, %v384
      %v396 = vsub.f32 %v369, %v393
      %v397 = vsel %vm265, %v395, 0.0
      %v398 = vsel %vm266, %v396, 0.0
      %vm399 = vcmask 1040384
      %v400 = vsel %vm399, %v397, 0.0
      %v401 = vsel %vm399, %v398, 0.0
      %v402 = vadd.f32 %v400, %v401
      %403 = vadd.xlane.f32.xlu0 %v402
      %v404 = vpop.xlane.xlu0 %403
      %v405 = vrot.slane %v404, 4
      %v406 = vadd.f32 %v404, %v405
      %v407 = vrot.slane %v406, 2
      %v408 = vadd.f32 %v406, %v407
      %v409 = vrot.slane %v408, 1
      %v410 = vadd.f32 %v408, %v409
      %s411 = vtos %v410
      %v412 = vstv %s411
      %v413 = vadd.f32 %v394, %v412
      %vm414 = vcmask 0
      %415 = vst.msk [vmem:[#allocation2] sm:$0x1] %vm414, %v413
      %v416 = vsel %vm289, 1.0, 0.0
      %v417 = vsel %vm290, 1.0, 0.0
      %v418 = vsel %vm291, 1.0, 0.0
      %v419 = vsel %vm292, 1.0, 0.0
      %v420 = vsel %vm293, 1.0, 0.0
      %v421 = vsel %vm294, 1.0, 0.0
      %v422 = vld [vmem:[#allocation3] sm:$0xff]
      %v423 = vld [vmem:[#allocation3 + $0x8] sm:$0xff]
      %v424 = vld [vmem:[#allocation3 + $0x10] sm:$0x3f]
      %v425 = vsel %vm289, %v358, 0.0
      %v426 = vsel %vm290, %v359, 0.0
      %v427 = vsel %vm291, %v360, 0.0
      %v428 = vsel %vm292, %v361, 0.0
      %v429 = vsel %vm293, %v362, 0.0
      %v430 = vsel %vm294, %v363, 0.0
      %v431 = vadd.f32 %v425, %v426
      %432 = vadd.xlane.f32.xlu0 %v431
      %v433 = vpop.xlane.xlu0 %432
      %v434 = vadd.f32 %v427, %v428
      %435 = vadd.xlane.f32.xlu0 %v434
      %v436 = vpop.xlane.xlu0 %435
      %v437 = vsel %vm301, %v429, 0.0
      %v438 = vsel %vm301, %v430, 0.0
      %v439 = vadd.f32 %v437, %v438
      %440 = vadd.xlane.f32.xlu0 %v439
      %v441 = vpop.xlane.xlu0 %440
      %v442 = vadd.f32 %v422, %v433
      %v443 = vadd.f32 %v423, %v436
      %v444 = vadd.f32 %v424, %v441
      %vm445 = vcmask 7168
      %446 = vst.msk [vmem:[#allocation3] sm:$0xff] %vm445, %v442
      %447 = vst.msk [vmem:[#allocation3 + $0x8] sm:$0xff] %vm445, %v443
      %vm448 = vcmask 5120
      %449 = vst.msk [vmem:[#allocation3 + $0x10] sm:$0x3f] %vm448, %v444
      %v450 = vld [vmem:[#allocation4] sm:$0xff]
      %v451 = vld [vmem:[#allocation4 + $0x8] sm:$0xff]
      %v452 = vld [vmem:[#allocation4 + $0x10] sm:$0x3f]
      %v453 = vsel %vm287, %v358, 0.0
      %v454 = vsel %vm288, %v359, 0.0
      %v455 = vsel %vm287, %v360, 0.0
      %v456 = vsel %vm288, %v361, 0.0
      %v457 = vsel %vm287, %v362, 0.0
      %v458 = vsel %vm288, %v363, 0.0
      %v459 = vadd.f32 %v453, %v416
      %v460 = vadd.f32 %v454, %v417
      %v461 = vadd.f32 %v455, %v418
      %v462 = vadd.f32 %v456, %v419
      %v463 = vadd.f32 %v457, %v420
      %v464 = vadd.f32 %v458, %v421
      %v465 = vadd.f32 %v459, %v460
      %466 = vadd.xlane.f32.xlu0 %v465
      %v467 = vpop.xlane.xlu0 %466
      %v468 = vadd.f32 %v461, %v462
      %469 = vadd.xlane.f32.xlu0 %v468
      %v470 = vpop.xlane.xlu0 %469
      %v471 = vsel %vm301, %v463, 0.0
      %v472 = vsel %vm301, %v464, 0.0
      %v473 = vadd.f32 %v471, %v472
      %474 = vadd.xlane.f32.xlu0 %v473
      %v475 = vpop.xlane.xlu0 %474
      %v476 = vadd.f32 %v450, %v467
      %v477 = vadd.f32 %v451, %v470
      %v478 = vadd.f32 %v452, %v475
      %479 = vst.msk [vmem:[#allocation4] sm:$0xff] %vm445, %v476
      %480 = vst.msk [vmem:[#allocation4 + $0x8] sm:$0xff] %vm445, %v477
      %481 = vst.msk [vmem:[#allocation4 + $0x10] sm:$0x3f] %vm448, %v478
      // Predicated region
      $region33: #{tpu_custom_call.1} parent=27 // pred_check
        %p482 = pneg %p237
      $region34: #{tpu_custom_call.1} parent=27 // pred_check_branch
        %484 = sbr.rel (%p482) target = $region36
      $region35: #{tpu_custom_call.1} parent=27 // pred_region
        %v485 = vld [vmem:[#allocation3] sm:$0xff]
        %v486 = vld [vmem:[#allocation3 + $0x8] sm:$0xff]
        %v487 = vld [vmem:[#allocation3 + $0x10] sm:$0x3f]
        %v488 = vmul.f32 %v485, 2.0
        %v489 = vmul.f32 %v486, 2.0
        %v490 = vmul.f32 %v487, 2.0
        %v491 = vadd.f32 %v488, 1e-05
        %v492 = vadd.f32 %v489, 1e-05
        %v493 = vadd.f32 %v490, 1e-05
        %v494 = vld [vmem:[#allocation4] sm:$0xff]
        %v495 = vld [vmem:[#allocation4 + $0x8] sm:$0xff]
        %v496 = vld [vmem:[#allocation4 + $0x10] sm:$0x3f]
        %v497 = vadd.f32 %v494, 1e-05
        %v498 = vadd.f32 %v495, 1e-05
        %v499 = vadd.f32 %v496, 1e-05
        %v500 = vrcp.pop %v497
        %v501 = vmul.f32 %v491, %v500
        %v502 = vrcp.pop %v498
        %v503 = vmul.f32 %v492, %v502
        %v504 = vrcp.pop %v499
        %v505 = vmul.f32 %v493, %v504
        %v506 = vld [vmem:[#allocation2] sm:$0x1]
        %507 = vst.msk [vmem:[%s233] sm:$0x1] %vm414, %v506
        %v508 = vsel %vm445, %v501, 0.0
        %v509 = vsel %vm445, %v503, 0.0
        %v510 = vadd.f32 %v508, %v509
        %v511 = vsel %vm448, %v505, 0.0
        %v512 = vadd.f32 %v510, %v511
        %513 = vadd.xlane.f32.xlu0 %v512
        %v514 = vpop.xlane.xlu0 %513
        %v515 = vrot.slane %v514, 4
        %v516 = vadd.f32 %v514, %v515
        %v517 = vrot.slane %v516, 2
        %v518 = vadd.f32 %v516, %v517
        %v519 = vrot.slane %v518, 1
        %v520 = vadd.f32 %v518, %v519
        %s521 = vtos %v520
        %v522 = vstv %s521
        %523 = vst.msk [vmem:[%s236] sm:$0x1] %vm414, %v522
      $region36: #{tpu_custom_call.1} parent=27 // pred_fallthru
        _
      %p524 = scmp.lt.s32.totalorder %s19, 1
      %s525 = scalar_select %p524, %s19, 1
      %s526 = scalar_lea.vmem %s2, %s525
      %p527 = scmp.lt.s32.totalorder %s19, 1
      %s528 = scalar_select %p527, %s19, 1
      %s529 = scalar_lea.vmem %s3, %s528
      // Predicated region
      $region37: #{tpu_custom_call.1} parent=27 // pred_check
        %p530 = pneg %p101
      $region38: #{tpu_custom_call.1} parent=27 // pred_check_branch
        %532 = sbr.rel (%p530) target = $region40
      $region39: #{tpu_custom_call.1} parent=27 // pred_region
        _
      $region40: #{tpu_custom_call.1} parent=27 // pred_fallthru
        _
      // Predicated region
      $region41: #{tpu_custom_call.1} parent=27 // pred_check
        %p533 = pneg %p127
      $region42: #{tpu_custom_call.1} parent=27 // pred_check_branch
        %535 = sbr.rel (%p533) target = $region44
      $region43: #{tpu_custom_call.1} parent=27 // pred_region
        _
      $region44: #{tpu_custom_call.1} parent=27 // pred_fallthru
        _
    $region28: #{tpu_custom_call.1} parent=5 // pred_fallthru
      _
    %p536 = scmp.le.s32.totalorder 2, %s10
    // Predicated region
    $region45: #{tpu_custom_call.1} parent=5 // pred_check
      %p537 = pneg %p536
    $region46: #{tpu_custom_call.1} parent=5 // pred_check_branch
      %539 = sbr.rel (%p537) target = $region48
    $region47: #{tpu_custom_call.1} parent=5 // pred_region
      %s540 = ssub.s32 %s10, 2
      // Predicated region
      $region49: #{tpu_custom_call.1} parent=47 // pred_check
        %p541 = pneg %p107
      $region50: #{tpu_custom_call.1} parent=47 // pred_check_branch
        %543 = sbr.rel (%p541) target = $region52
      $region51: #{tpu_custom_call.1} parent=47 // pred_region
        %p544 = scmp.lt.s32.totalorder %s21, 1
        %s545 = scalar_select %p544, %s21, 1
        %s546 = scalar_lea.vmem %s2, %s545
      $region52: #{tpu_custom_call.1} parent=47 // pred_fallthru
        _
      // Predicated region
      $region53: #{tpu_custom_call.1} parent=47 // pred_check
        %p547 = pneg %p133
      $region54: #{tpu_custom_call.1} parent=47 // pred_check_branch
        %549 = sbr.rel (%p547) target = $region56
      $region55: #{tpu_custom_call.1} parent=47 // pred_region
        %p550 = scmp.lt.s32.totalorder %s21, 1
        %s551 = scalar_select %p550, %s21, 1
        %s552 = scalar_lea.vmem %s3, %s551
      $region56: #{tpu_custom_call.1} parent=47 // pred_fallthru
        _
    $region48: #{tpu_custom_call.1} parent=5 // pred_fallthru
      _
  $region6: #{tpu_custom_call.1} parent=0 // loop_footer
    %s14 = sadd.s32 1, %s10
  $region7: #{tpu_custom_call.1} parent=0 // loop_footer_branch
    %9 = sbr.rel target = $region3
  $region8: #{tpu_custom_call.1} parent=0 // loop_exit
    _

</llo_original>
